<compile_context>
chip_gen: v5e
topology: v5e:2x2
jax: 0.10.0
libtpu: 0.0.40
codegen_flags: <defaults>
</compile_context>

<pallas_src>
import jax
import jax.numpy as jnp
from jax.experimental import pallas as pl
from jax.experimental.pallas import tpu as pltpu


def _round_up(x, n):
    return ((x + n - 1) // n) * n


def _seq_label_kernel(x_ref, w1_ref, b1_ref, wh_ref, bh_ref, out_ref, acc_ref):
    # x_ref:  (TM, TK) bf16      w1_ref: (TK, H2) bf16     b1_ref: (1, H2) f32
    # wh_ref: (H2, Npad) bf16 packed [W_sub | W_obj | 0-pad]
    # bh_ref: (1, Npad) f32      out_ref: (TM, Npad)       acc_ref: (TM, H2) f32
    k = pl.program_id(1)

    @pl.when(k == 0)
    def _():
        acc_ref[...] = jnp.zeros_like(acc_ref)

    # Partial product over the hidden (K) axis: bf16 MXU, f32 accumulation.
    acc_ref[...] += jnp.dot(x_ref[...], w1_ref[...],
                            preferred_element_type=jnp.float32)

    @pl.when(k == pl.num_programs(1) - 1)
    def _():
        # Bias + ReLU in f32.
        h = jnp.maximum(acc_ref[...] + b1_ref[...], jnp.float32(0.0))
        # TODO(synk): training-mode dropout would need pltpu.prng_seed /
        # prng_random_bits; eval-mode (inference) dropout is the identity.
        y = jnp.dot(h.astype(wh_ref.dtype), wh_ref[...],
                    preferred_element_type=jnp.float32)
        out_ref[...] = (y + bh_ref[...]).astype(out_ref.dtype)


def pack_params(params, compute_dtype=jnp.bfloat16):
    """One-time packing of the module parameters for the kernel.

    Weights are cast to the MXU compute dtype (bf16); both tag heads are fused
    into a single lane-dense (h2, >=128) matrix so the kernel issues one
    unmasked full-width store.  Call once and reuse across forward calls so
    the concat/pad/cast stays out of the hot path.
    """
    w1, b1 = params["w1"], params["b1"]
    ws, bsub = params["w_sub"], params["b_sub"]
    wo, bobj = params["w_obj"], params["b_obj"]
    hidden, h2 = w1.shape
    tag_size = ws.shape[1]
    n_heads = 2 * tag_size
    n_pad = max(128, _round_up(n_heads, 128))

    wh = jnp.concatenate([ws, wo], axis=1)
    wh = jnp.pad(wh, ((0, 0), (0, n_pad - n_heads))).astype(compute_dtype)
    bh = jnp.concatenate([bsub, bobj]).reshape(1, n_heads)
    bh = jnp.pad(bh, ((0, 0), (0, n_pad - n_heads))).astype(jnp.float32)

    return {
        "w1": w1.astype(compute_dtype),
        "b1": b1.reshape(1, h2).astype(jnp.float32),
        "wh": wh,
        "bh": bh,
        "hidden": hidden,
        "h2": h2,
        "tag_size": tag_size,
        "n_pad": n_pad,
    }


def _choose_tile_m(m, tm):
    """Pick an M tile: multiple of 8, prefers dividing round_up(m, 8) exactly
    (no padded rows DMA'd / computed), and leaves >= 2 grid steps when M is
    large enough so v7x's two TensorCores both get work."""
    m8 = _round_up(m, 8)
    tile = min(_round_up(tm, 8), m8)
    if m8 >= 512 and m8 < 2 * tile:
        tile = _round_up((m8 + 1) // 2, 8)
    if m8 % tile != 0:
        for cand in range(tile, max(8, tile // 2) - 1, -8):
            if m8 % cand == 0:
                tile = cand
                break
    return tile, _round_up(m8, tile)


def _choose_tile_k(hidden, h2, itemsize, budget_bytes=20 << 20):
    """Keep W1 fully VMEM-resident unless it exceeds the weight budget; then
    tile the hidden axis in multiples of 128 (keeps v7x's 64 MiB VMEM safe
    without shrinking tile_m)."""
    if hidden * h2 * itemsize <= budget_bytes or hidden % 128 != 0:
        return hidden
    tk = max(128, min((budget_bytes // (h2 * itemsize)) // 128 * 128, hidden))
    while tk > 128 and hidden % tk != 0:
        tk -= 128
    return tk if hidden % tk == 0 else hidden


def sequence_label_for_so(x, packed, *, tm=1024):
    """x: (bs, seq_len, hidden); packed: output of pack_params.
    Returns (sub, obj), each (bs, seq_len, tag_size) in x.dtype."""
    bs, seq_len, hidden = x.shape
    w1, b1 = packed["w1"], packed["b1"]
    wh, bh = packed["wh"], packed["bh"]
    h2, n_pad, tag_size = packed["h2"], packed["n_pad"], packed["tag_size"]
    cdtype = w1.dtype
    csize = jnp.dtype(cdtype).itemsize
    out_dtype = jnp.bfloat16
    osize = jnp.dtype(out_dtype).itemsize

    m = bs * seq_len
    tile_m, m_pad = _choose_tile_m(m, tm)
    tile_k = _choose_tile_k(hidden, h2, csize)
    m_tiles, k_tiles = m_pad // tile_m, hidden // tile_k

    x2d = x.reshape(m, hidden).astype(cdtype)
    if m_pad != m:
        x2d = jnp.pad(x2d, ((0, m_pad - m), (0, 0)))

    flops = 2 * m_pad * hidden * h2 + 2 * m_pad * h2 * n_pad
    bytes_accessed = int(
        m_pad * hidden * csize
        + hidden * h2 * csize * (m_tiles if k_tiles > 1 else 1)
        + h2 * n_pad * csize
        + (h2 + n_pad) * 4
        + m_pad * n_pad * osize)

    def run(single_buffer_weights):
        def resident(shape):
            # Constant-index operands stay VMEM-resident across grid steps;
            # Buffered(1) drops the default second buffer (weight VMEM /2).
            if single_buffer_weights:
                return pl.BlockSpec(shape, lambda i, k: (0, 0),
                                    pipeline_mode=pl.Buffered(1))
            return pl.BlockSpec(shape, lambda i, k: (0, 0))

        if k_tiles == 1:
            w1_spec = resident((tile_k, h2))
        else:
            # K-tiled path: W1 block changes per k step; keep default buffering.
            w1_spec = pl.BlockSpec((tile_k, h2), lambda i, k: (k, 0))

        n_w_buf = 1 if (single_buffer_weights and k_tiles == 1) else 2
        vmem_bytes = (
            2 * tile_m * tile_k * csize          # x tiles (double-buffered)
            + n_w_buf * tile_k * h2 * csize      # W1
            + n_w_buf * h2 * n_pad * csize       # packed head weights
            + 4 * 8 * 128 * 4                    # biases (padded vreg tiles)
            + 2 * tile_m * n_pad * osize         # out tiles (double-buffered)
            + tile_m * h2 * 4)                   # f32 accumulator scratch
        vmem_limit = min(max(int(vmem_bytes * 1.5) + (4 << 20), 32 << 20),
                         100 << 20)

        return pl.pallas_call(
            _seq_label_kernel,
            out_shape=jax.ShapeDtypeStruct((m_pad, n_pad), out_dtype),
            grid=(m_tiles, k_tiles),
            in_specs=[
                pl.BlockSpec((tile_m, tile_k), lambda i, k: (i, k)),  # x tile
                w1_spec,                                              # W1
                resident((1, h2)),                                    # b1
                resident((h2, n_pad)),                                # heads
                resident((1, n_pad)),                                 # head bias
            ],
            out_specs=pl.BlockSpec((tile_m, n_pad), lambda i, k: (i, 0)),
            scratch_shapes=[pltpu.VMEM((tile_m, h2), jnp.float32)],
            compiler_params=pltpu.CompilerParams(
                dimension_semantics=("parallel", "arbitrary"),
                vmem_limit_bytes=vmem_limit),
            cost_estimate=pl.CostEstimate(
                flops=flops, transcendentals=0,
                bytes_accessed=bytes_accessed),
        )(x2d, w1, b1, wh, bh)

    try:
        out = run(True)
    except Exception:
        # pl.Buffered(1) not supported by this JAX/Mosaic build: fall back to
        # default double-buffering of the resident operands (correctness
        # identical, slightly higher VMEM use).
        out = run(False)

    sub = out[:m, :tag_size].astype(x.dtype).reshape(bs, seq_len, tag_size)
    obj = out[:m, tag_size:2 * tag_size].astype(x.dtype).reshape(
        bs, seq_len, tag_size)
    return sub, obj


def init_params(key, hidden_size, tag_size, dtype=jnp.float32):
    """Deterministic synthetic init matching the nn.Module parameter shapes
    (weights stored transposed as (in, out))."""
    h2 = hidden_size // 2
    k1, k2, k3, k4, k5, k6 = jax.random.split(key, 6)
    scale = 0.05
    return {
        "w1":    scale * jax.random.normal(k1, (hidden_size, h2), dtype),
        "b1":    scale * jax.random.normal(k2, (h2,), dtype),
        "w_sub": scale * jax.random.normal(k3, (h2, tag_size), dtype),
        "b_sub": scale * jax.random.normal(k4, (tag_size,), dtype),
        "w_obj": scale * jax.random.normal(k5, (h2, tag_size), dtype),
        "b_obj": scale * jax.random.normal(k6, (tag_size,), dtype),
    }


def _reference(x, p):
    # Pure-JAX f32 reference for the correctness check.
    t = jnp.maximum(jnp.einsum("bsh,hk->bsk", x, p["w1"]) + p["b1"], 0.0)
    sub = jnp.einsum("bsk,kt->bst", t, p["w_sub"]) + p["b_sub"]
    obj = jnp.einsum("bsk,kt->bst", t, p["w_obj"]) + p["b_obj"]
    return sub, obj


if __name__ == "__main__":
    bs, seq_len, hidden_size, tag_size = 2, 8, 32, 5
    key = jax.random.PRNGKey(0)
    kx, kp = jax.random.split(key)

    x = jax.random.normal(kx, (bs, seq_len, hidden_size), jnp.float32)
    params = init_params(kp, hidden_size, tag_size)
    packed = pack_params(params)          # one-time weight packing / bf16 cast

    sub, obj = sequence_label_for_so(x, packed)
    sub = jax.block_until_ready(sub)
    obj = jax.block_until_ready(obj)

    sub_ref, obj_ref = _reference(x, params)
    assert sub.shape == (bs, seq_len, tag_size)
    assert obj.shape == (bs, seq_len, tag_size)
    # bf16 MXU path vs f32 reference -> loosened tolerance.
    assert jnp.allclose(sub, sub_ref, atol=3e-2, rtol=3e-2)
    assert jnp.allclose(obj, obj_ref, atol=3e-2, rtol=3e-2)

    print("KERNEL_OK")
</pallas_src>

<mosaic_0001>
module attributes {stable_mosaic.version = 11 : i64} {
  func.func @_seq_label_kernel(%arg0: i32, %arg1: i32, %arg2: memref<16x32xbf16, #tpu.memory_space<vmem>>, %arg3: memref<32x16xbf16, #tpu.memory_space<vmem>>, %arg4: memref<1x16xf32, #tpu.memory_space<vmem>>, %arg5: memref<16x128xbf16, #tpu.memory_space<vmem>>, %arg6: memref<1x128xf32, #tpu.memory_space<vmem>>, %arg7: memref<16x128xbf16, #tpu.memory_space<vmem>>, %arg8: memref<16x16xf32, #tpu.memory_space<vmem>>) attributes {dimension_semantics = [#tpu.dimension_semantics<parallel>, #tpu.dimension_semantics<arbitrary>], iteration_bounds = array<i64: 1, 1>, scalar_prefetch = 0 : i64, scratch_operands = 1 : i64, tpu.core_type = #tpu.core_type<tc>, window_params = [{transform_indices = @transform_0, window_bounds = array<i64: 16, 32>}, {pipeline_mode = #tpu.pipeline_mode<synchronous>, transform_indices = @transform_1, window_bounds = array<i64: 32, 16>}, {pipeline_mode = #tpu.pipeline_mode<synchronous>, transform_indices = @transform_2, window_bounds = array<i64: 1, 16>}, {pipeline_mode = #tpu.pipeline_mode<synchronous>, transform_indices = @transform_3, window_bounds = array<i64: 16, 128>}, {pipeline_mode = #tpu.pipeline_mode<synchronous>, transform_indices = @transform_4, window_bounds = array<i64: 1, 128>}, {transform_indices = @transform_5, window_bounds = array<i64: 16, 128>}]} {
    %c0_i32 = arith.constant 0 : i32
    %0 = arith.cmpi eq, %arg1, %c0_i32 : i32
    %1 = arith.extui %0 : i1 to i32
    %c0_i32_0 = arith.constant 0 : i32
    %2 = arith.cmpi ne, %1, %c0_i32_0 : i32
    scf.if %2 {
      %cst_10 = arith.constant 0.000000e+00 : f32
      %12 = vector.broadcast %cst_10 : f32 to vector<16x16xf32>
      %c0_11 = arith.constant 0 : index
      %c0_12 = arith.constant 0 : index
      %13 = vector.load %arg8[%c0_11, %c0_12] : memref<16x16xf32, #tpu.memory_space<vmem>>, vector<16x16xf32>
      tpu.vector_store %arg8[%c0_11, %c0_12], %12 {strides = array<i32>} : memref<16x16xf32, #tpu.memory_space<vmem>>, vector<16x16xf32>,
    } else {
    }
    %c0 = arith.constant 0 : index
    %c0_1 = arith.constant 0 : index
    %3 = vector.load %arg8[%c0, %c0_1] : memref<16x16xf32, #tpu.memory_space<vmem>>, vector<16x16xf32>
    %c0_2 = arith.constant 0 : index
    %c0_3 = arith.constant 0 : index
    %4 = vector.load %arg2[%c0_2, %c0_3] : memref<16x32xbf16, #tpu.memory_space<vmem>>, vector<16x32xbf16>
    %c0_4 = arith.constant 0 : index
    %c0_5 = arith.constant 0 : index
    %5 = vector.load %arg3[%c0_4, %c0_5] : memref<32x16xbf16, #tpu.memory_space<vmem>>, vector<32x16xbf16>
    %cst = arith.constant dense<0.000000e+00> : vector<16x16xf32>
    %6 = tpu.matmul %4, %5, %cst {dimension_numbers = #tpu.dot_dimension_numbers<[1], [0], [0], [1], [0, 0, 1, 1], [], []>} : vector<16x32xbf16>, vector<32x16xbf16>, vector<16x16xf32> -> vector<16x16xf32>
    %7 = arith.addf %3, %6 : vector<16x16xf32>
    %c0_6 = arith.constant 0 : index
    %c0_7 = arith.constant 0 : index
    %8 = vector.load %arg8[%c0_6, %c0_7] : memref<16x16xf32, #tpu.memory_space<vmem>>, vector<16x16xf32>
    tpu.vector_store %arg8[%c0_6, %c0_7], %7 {strides = array<i32>} : memref<16x16xf32, #tpu.memory_space<vmem>>, vector<16x16xf32>,
    %c0_i32_8 = arith.constant 0 : i32
    %9 = arith.cmpi eq, %arg1, %c0_i32_8 : i32
    %10 = arith.extui %9 : i1 to i32
    %c0_i32_9 = arith.constant 0 : i32
    %11 = arith.cmpi ne, %10, %c0_i32_9 : i32
    scf.if %11 {
      %c0_10 = arith.constant 0 : index
      %c0_11 = arith.constant 0 : index
      %12 = vector.load %arg8[%c0_10, %c0_11] : memref<16x16xf32, #tpu.memory_space<vmem>>, vector<16x16xf32>
      %c0_12 = arith.constant 0 : index
      %c0_13 = arith.constant 0 : index
      %13 = vector.load %arg4[%c0_12, %c0_13] : memref<1x16xf32, #tpu.memory_space<vmem>>, vector<1x16xf32>
      %14 = vector.broadcast %13 : vector<1x16xf32> to vector<16x16xf32>
      %15 = arith.addf %12, %14 : vector<16x16xf32>
      %cst_14 = arith.constant 0.000000e+00 : f32
      %16 = vector.broadcast %cst_14 : f32 to vector<16x16xf32>
      %17 = arith.maximumf %15, %16 : vector<16x16xf32>
      %18 = arith.truncf %17 : vector<16x16xf32> to vector<16x16xbf16>
      %c0_15 = arith.constant 0 : index
      %c0_16 = arith.constant 0 : index
      %19 = vector.load %arg5[%c0_15, %c0_16] : memref<16x128xbf16, #tpu.memory_space<vmem>>, vector<16x128xbf16>
      %cst_17 = arith.constant dense<0.000000e+00> : vector<16x128xf32>
      %20 = tpu.matmul %18, %19, %cst_17 {dimension_numbers = #tpu.dot_dimension_numbers<[1], [0], [0], [1], [0, 0, 1, 1], [], []>} : vector<16x16xbf16>, vector<16x128xbf16>, vector<16x128xf32> -> vector<16x128xf32>
      %c0_18 = arith.constant 0 : index
      %c0_19 = arith.constant 0 : index
      %21 = vector.load %arg6[%c0_18, %c0_19] : memref<1x128xf32, #tpu.memory_space<vmem>>, vector<1x128xf32>
      %22 = vector.broadcast %21 : vector<1x128xf32> to vector<16x128xf32>
      %23 = arith.addf %20, %22 : vector<16x128xf32>
      %24 = arith.truncf %23 : vector<16x128xf32> to vector<16x128xbf16>
      %c0_20 = arith.constant 0 : index
      %c0_21 = arith.constant 0 : index
      %25 = vector.load %arg7[%c0_20, %c0_21] : memref<16x128xbf16, #tpu.memory_space<vmem>>, vector<16x128xbf16>
      tpu.vector_store %arg7[%c0_20, %c0_21], %24 {strides = array<i32>} : memref<16x128xbf16, #tpu.memory_space<vmem>>, vector<16x128xbf16>,
    } else {
    }
    return
  }
  func.func @transform_0(%arg0: i32, %arg1: i32) -> (i32, i32) {
    %c0_i32 = arith.constant 0 : i32
    return %arg0, %arg1 : i32, i32
  }
  func.func @transform_1(%arg0: i32, %arg1: i32) -> (i32, i32) {
    %c0_i32 = arith.constant 0 : i32
    %c0_i32_0 = arith.constant 0 : i32
    %c0_i32_1 = arith.constant 0 : i32
    return %c0_i32, %c0_i32_0 : i32, i32
  }
  func.func @transform_2(%arg0: i32, %arg1: i32) -> (i32, i32) {
    %c0_i32 = arith.constant 0 : i32
    %c0_i32_0 = arith.constant 0 : i32
    %c0_i32_1 = arith.constant 0 : i32
    return %c0_i32, %c0_i32_0 : i32, i32
  }
  func.func @transform_3(%arg0: i32, %arg1: i32) -> (i32, i32) {
    %c0_i32 = arith.constant 0 : i32
    %c0_i32_0 = arith.constant 0 : i32
    %c0_i32_1 = arith.constant 0 : i32
    return %c0_i32, %c0_i32_0 : i32, i32
  }
  func.func @transform_4(%arg0: i32, %arg1: i32) -> (i32, i32) {
    %c0_i32 = arith.constant 0 : i32
    %c0_i32_0 = arith.constant 0 : i32
    %c0_i32_1 = arith.constant 0 : i32
    return %c0_i32, %c0_i32_0 : i32, i32
  }
  func.func @transform_5(%arg0: i32, %arg1: i32) -> (i32, i32) {
    %c0_i32 = arith.constant 0 : i32
    %c0_i32_0 = arith.constant 0 : i32
    return %arg0, %c0_i32 : i32, i32
  }
}

module attributes {stable_mosaic.version = 11 : i64} {
  func.func @_seq_label_kernel(%arg0: i32, %arg1: i32, %arg2: memref<16x32xbf16, #tpu.memory_space<vmem>>, %arg3: memref<32x16xbf16, #tpu.memory_space<vmem>>, %arg4: memref<1x16xf32, #tpu.memory_space<vmem>>, %arg5: memref<16x128xbf16, #tpu.memory_space<vmem>>, %arg6: memref<1x128xf32, #tpu.memory_space<vmem>>, %arg7: memref<16x128xbf16, #tpu.memory_space<vmem>>, %arg8: memref<16x16xf32, #tpu.memory_space<vmem>>) attributes {dimension_semantics = [#tpu.dimension_semantics<parallel>, #tpu.dimension_semantics<arbitrary>], iteration_bounds = array<i64: 1, 1>, scalar_prefetch = 0 : i64, scratch_operands = 1 : i64, tpu.core_type = #tpu.core_type<tc>, window_params = [{transform_indices = @transform_0, window_bounds = array<i64: 16, 32>}, {pipeline_mode = #tpu.pipeline_mode<synchronous>, transform_indices = @transform_1, window_bounds = array<i64: 32, 16>}, {pipeline_mode = #tpu.pipeline_mode<synchronous>, transform_indices = @transform_2, window_bounds = array<i64: 1, 16>}, {pipeline_mode = #tpu.pipeline_mode<synchronous>, transform_indices = @transform_3, window_bounds = array<i64: 16, 128>}, {pipeline_mode = #tpu.pipeline_mode<synchronous>, transform_indices = @transform_4, window_bounds = array<i64: 1, 128>}, {transform_indices = @transform_5, window_bounds = array<i64: 16, 128>}]} {
    %c0_i32 = arith.constant 0 : i32
    %0 = arith.cmpi eq, %arg1, %c0_i32 : i32
    %1 = arith.extui %0 : i1 to i32
    %c0_i32_0 = arith.constant 0 : i32
    %2 = arith.cmpi ne, %1, %c0_i32_0 : i32
    scf.if %2 {
      %cst_10 = arith.constant 0.000000e+00 : f32
      %12 = vector.broadcast %cst_10 : f32 to vector<16x16xf32>
      %c0_11 = arith.constant 0 : index
      %c0_12 = arith.constant 0 : index
      %13 = vector.load %arg8[%c0_11, %c0_12] : memref<16x16xf32, #tpu.memory_space<vmem>>, vector<16x16xf32>
      tpu.vector_store %arg8[%c0_11, %c0_12], %12 {strides = array<i32>} : memref<16x16xf32, #tpu.memory_space<vmem>>, vector<16x16xf32>,
    } else {
    }
    %c0 = arith.constant 0 : index
    %c0_1 = arith.constant 0 : index
    %3 = vector.load %arg8[%c0, %c0_1] : memref<16x16xf32, #tpu.memory_space<vmem>>, vector<16x16xf32>
    %c0_2 = arith.constant 0 : index
    %c0_3 = arith.constant 0 : index
    %4 = vector.load %arg2[%c0_2, %c0_3] : memref<16x32xbf16, #tpu.memory_space<vmem>>, vector<16x32xbf16>
    %c0_4 = arith.constant 0 : index
    %c0_5 = arith.constant 0 : index
    %5 = vector.load %arg3[%c0_4, %c0_5] : memref<32x16xbf16, #tpu.memory_space<vmem>>, vector<32x16xbf16>
    %cst = arith.constant dense<0.000000e+00> : vector<16x16xf32>
    %6 = tpu.matmul %4, %5, %cst {dimension_numbers = #tpu.dot_dimension_numbers<[1], [0], [0], [1], [0, 0, 1, 1], [], []>} : vector<16x32xbf16>, vector<32x16xbf16>, vector<16x16xf32> -> vector<16x16xf32>
    %7 = arith.addf %3, %6 : vector<16x16xf32>
    %c0_6 = arith.constant 0 : index
    %c0_7 = arith.constant 0 : index
    %8 = vector.load %arg8[%c0_6, %c0_7] : memref<16x16xf32, #tpu.memory_space<vmem>>, vector<16x16xf32>
    tpu.vector_store %arg8[%c0_6, %c0_7], %7 {strides = array<i32>} : memref<16x16xf32, #tpu.memory_space<vmem>>, vector<16x16xf32>,
    %c0_i32_8 = arith.constant 0 : i32
    %9 = arith.cmpi eq, %arg1, %c0_i32_8 : i32
    %10 = arith.extui %9 : i1 to i32
    %c0_i32_9 = arith.constant 0 : i32
    %11 = arith.cmpi ne, %10, %c0_i32_9 : i32
    scf.if %11 {
      %c0_10 = arith.constant 0 : index
      %c0_11 = arith.constant 0 : index
      %12 = vector.load %arg8[%c0_10, %c0_11] : memref<16x16xf32, #tpu.memory_space<vmem>>, vector<16x16xf32>
      %c0_12 = arith.constant 0 : index
      %c0_13 = arith.constant 0 : index
      %13 = vector.load %arg4[%c0_12, %c0_13] : memref<1x16xf32, #tpu.memory_space<vmem>>, vector<1x16xf32>
      %14 = vector.broadcast %13 : vector<1x16xf32> to vector<16x16xf32>
      %15 = arith.addf %12, %14 : vector<16x16xf32>
      %cst_14 = arith.constant 0.000000e+00 : f32
      %16 = vector.broadcast %cst_14 : f32 to vector<16x16xf32>
      %17 = arith.maximumf %15, %16 : vector<16x16xf32>
      %18 = arith.truncf %17 : vector<16x16xf32> to vector<16x16xbf16>
      %c0_15 = arith.constant 0 : index
      %c0_16 = arith.constant 0 : index
      %19 = vector.load %arg5[%c0_15, %c0_16] : memref<16x128xbf16, #tpu.memory_space<vmem>>, vector<16x128xbf16>
      %cst_17 = arith.constant dense<0.000000e+00> : vector<16x128xf32>
      %20 = tpu.matmul %18, %19, %cst_17 {dimension_numbers = #tpu.dot_dimension_numbers<[1], [0], [0], [1], [0, 0, 1, 1], [], []>} : vector<16x16xbf16>, vector<16x128xbf16>, vector<16x128xf32> -> vector<16x128xf32>
      %c0_18 = arith.constant 0 : index
      %c0_19 = arith.constant 0 : index
      %21 = vector.load %arg6[%c0_18, %c0_19] : memref<1x128xf32, #tpu.memory_space<vmem>>, vector<1x128xf32>
      %22 = vector.broadcast %21 : vector<1x128xf32> to vector<16x128xf32>
      %23 = arith.addf %20, %22 : vector<16x128xf32>
      %24 = arith.truncf %23 : vector<16x128xf32> to vector<16x128xbf16>
      %c0_20 = arith.constant 0 : index
      %c0_21 = arith.constant 0 : index
      %25 = vector.load %arg7[%c0_20, %c0_21] : memref<16x128xbf16, #tpu.memory_space<vmem>>, vector<16x128xbf16>
      tpu.vector_store %arg7[%c0_20, %c0_21], %24 {strides = array<i32>} : memref<16x128xbf16, #tpu.memory_space<vmem>>, vector<16x128xbf16>,
    } else {
    }
    return
  }
  func.func @transform_0(%arg0: i32, %arg1: i32) -> (i32, i32) {
    %c0_i32 = arith.constant 0 : i32
    return %arg0, %arg1 : i32, i32
  }
  func.func @transform_1(%arg0: i32, %arg1: i32) -> (i32, i32) {
    %c0_i32 = arith.constant 0 : i32
    %c0_i32_0 = arith.constant 0 : i32
    %c0_i32_1 = arith.constant 0 : i32
    return %c0_i32, %c0_i32_0 : i32, i32
  }
  func.func @transform_2(%arg0: i32, %arg1: i32) -> (i32, i32) {
    %c0_i32 = arith.constant 0 : i32
    %c0_i32_0 = arith.constant 0 : i32
    %c0_i32_1 = arith.constant 0 : i32
    return %c0_i32, %c0_i32_0 : i32, i32
  }
  func.func @transform_3(%arg0: i32, %arg1: i32) -> (i32, i32) {
    %c0_i32 = arith.constant 0 : i32
    %c0_i32_0 = arith.constant 0 : i32
    %c0_i32_1 = arith.constant 0 : i32
    return %c0_i32, %c0_i32_0 : i32, i32
  }
  func.func @transform_4(%arg0: i32, %arg1: i32) -> (i32, i32) {
    %c0_i32 = arith.constant 0 : i32
    %c0_i32_0 = arith.constant 0 : i32
    %c0_i32_1 = arith.constant 0 : i32
    return %c0_i32, %c0_i32_0 : i32, i32
  }
  func.func @transform_5(%arg0: i32, %arg1: i32) -> (i32, i32) {
    %c0_i32 = arith.constant 0 : i32
    %c0_i32_0 = arith.constant 0 : i32
    return %arg0, %c0_i32 : i32, i32
  }
}

</mosaic_0001>

<llo_original>
// kernel: tpu_custom_call.1
$region0: #{tpu_custom_call.1}
  #allocation0 [shape = 'u32[]', space=smem, size = 0x4, offset = 0x4, fixed_abs, tag = 'smem constant byte address 0x4 - core index']
  #allocation1 [shape = 'u32[72,128]{1,0:T(1,128)}', space=vmem, size = 0x9000, scoped, tag = 'internal scratch']
  #allocation2 [shape = 'f32[16,16]{1,0:T(8,128)}', space=vmem, size = 0x2000, scoped, tag = 'scratch operand']
  %s0 = inlined_call_operand.vmem [shape: bf16[16,32], index: 0, kind: input, shape index: {}]
  %s1 = inlined_call_operand.vmem [shape: bf16[32,16], index: 1, kind: input, shape index: {}]
  %s2 = inlined_call_operand.vmem [shape: f32[1,16], index: 2, kind: input, shape index: {}]
  %s3 = inlined_call_operand.vmem [shape: bf16[16,128], index: 3, kind: input, shape index: {}]
  %s4 = inlined_call_operand.vmem [shape: f32[1,128], index: 4, kind: input, shape index: {}]
  %s5 = inlined_call_operand.hbm [shape: bf16[16,128], index: 5, kind: output, shape index: {}]
  %s6 = sld [smem:[#allocation0]]
  $region38: #{tpu_custom_call.1} parent=0
    _
  %s8 = ssub.s32 1, %s6
  %s9 = scalar_select 0, %s8, %s6
  $region1: #{tpu_custom_call.1} parent=0
    #allocation3 [shape = 'u8[4096]{0}', space=vmem, size = 0x1000, scoped, tag = 'output window, operand 0, single buffered']
    #allocation4 [shape = 's32[1]{0}', space=sflag, size = 0x4, scoped, tag = 'scoped memory for tpu_custom_call.1']
    %10 = vsyncpa [#allocation4], 0
    // Predicated region
    $region2: #{tpu_custom_call.1} parent=1 // pred_check
      _
    $region3: #{tpu_custom_call.1} parent=1 // pred_check_branch
      %12 = sbr.rel (0) target = $region5
    $region4: #{tpu_custom_call.1} parent=1 // pred_region
      _
    $region5: #{tpu_custom_call.1} parent=1 // pred_fallthru
      _
    // Predicated region
    $region6: #{tpu_custom_call.1} parent=1 // pred_check
      _
    $region7: #{tpu_custom_call.1} parent=1 // pred_check_branch
      %14 = sbr.rel (0) target = $region9
    $region8: #{tpu_custom_call.1} parent=1 // pred_region
      _
    $region9: #{tpu_custom_call.1} parent=1 // pred_fallthru
      _
    // Predicated region
    $region10: #{tpu_custom_call.1} parent=1 // pred_check
      _
    $region11: #{tpu_custom_call.1} parent=1 // pred_check_branch
      %16 = sbr.rel (0) target = $region13
    $region12: #{tpu_custom_call.1} parent=1 // pred_region
      _
    $region13: #{tpu_custom_call.1} parent=1 // pred_fallthru
      _
    // Predicated region
    $region14: #{tpu_custom_call.1} parent=1 // pred_check
      _
    $region15: #{tpu_custom_call.1} parent=1 // pred_check_branch
      %18 = sbr.rel (0) target = $region17
    $region16: #{tpu_custom_call.1} parent=1 // pred_region
      _
    $region17: #{tpu_custom_call.1} parent=1 // pred_fallthru
      _
    // Predicated region
    $region18: #{tpu_custom_call.1} parent=1 // pred_check
      _
    $region19: #{tpu_custom_call.1} parent=1 // pred_check_branch
      %20 = sbr.rel (0) target = $region21
    $region20: #{tpu_custom_call.1} parent=1 // pred_region
      _
    $region21: #{tpu_custom_call.1} parent=1 // pred_fallthru
      _
    %p22 = scmp.eq.s32.totalorder 0, 0
    // Predicated region
    $region22: #{tpu_custom_call.1} parent=1 // pred_check
      %p23 = pneg %p22
    $region23: #{tpu_custom_call.1} parent=1 // pred_check_branch
      %25 = sbr.rel (%p23) target = $region25
    $region24: #{tpu_custom_call.1} parent=1 // pred_region
      %vm26 = vcmask 130048
      %27 = vst.msk [vmem:[#allocation2] sm:$0xff] %vm26, 0.0
      %28 = vst.msk [vmem:[#allocation2 + $0x8] sm:$0xff] %vm26, 0.0
    $region25: #{tpu_custom_call.1} parent=1 // pred_fallthru
      _
    %v29 = vld [vmem:[#allocation2] sm:$0xff]
    %v30 = vld [vmem:[#allocation2 + $0x8] sm:$0xff]
    %v31 = vld [vmem:[%s0] sm:$0xf]
    %v32 = vld [vmem:[%s0 + $0x4] sm:$0xf]
    %v33 = vld [vmem:[%s1] sm:$0xf]
    %v34 = vld [vmem:[%s1 + $0x4] sm:$0xf]
    %v35 = vld [vmem:[%s1 + $0x8] sm:$0xf]
    %v36 = vld [vmem:[%s1 + $0xc] sm:$0xf]
    %v39 = vunpack.c.l.b16 %v31
    %v40 = vunpack.c.l.b16 %v32
    %v41 = vpack.c.b16 %v40, %v39
    %v46 = vunpack.c.l.b16 %v33
    %v47 = vunpack.c.l.b16 %v34
    %v48 = vunpack.c.l.b16 %v35
    %v49 = vunpack.c.l.b16 %v36
    %v50 = vpack.c.b16 %v47, %v46
    %v51 = vpack.c.b16 %v49, %v48
    %vm54 = vcmask 261120
    %v56 = vsel %vm54, %v41, 0
    %58 = vmatpush.bf16.msra.mxu0 0
    %59 = vmatpush.bf16.msra.mxu0 0
    %60 = vmatpush.bf16.msra.mxu0 0
    %61 = vmatpush.bf16.msra.mxu0 0
    %62 = vmatpush.bf16.msra.mxu0 0
    %63 = vmatpush.bf16.msra.mxu0 0
    %64 = vmatpush.bf16.msra.mxu0 %v51
    %65 = vmatpush.bf16.msra.mxu0 %v50
    %66 = vmatmul.bf16.gmra.mxu0 %v56
    %v67 = vpop.f32.mrf.mxu0
    %v68 = vadd.f32 0.0, %v67
    %v69 = vpop.f32.mrf.mxu0
    %v70 = vadd.f32 0.0, %v69
    %71 = vdwg.mxu0
    %v72 = vadd.f32 %v29, %v68
    %v73 = vadd.f32 %v30, %v70
    %vm74 = vcmask 130048
    %75 = vst.msk [vmem:[#allocation2] sm:$0xff] %vm74, %v72
    %76 = vst.msk [vmem:[#allocation2 + $0x8] sm:$0xff] %vm74, %v73
    // Predicated region
    $region26: #{tpu_custom_call.1} parent=1 // pred_check
      %p77 = pneg %p22
    $region27: #{tpu_custom_call.1} parent=1 // pred_check_branch
      %79 = sbr.rel (%p77) target = $region29
    $region28: #{tpu_custom_call.1} parent=1 // pred_region
      %v80 = vld [vmem:[#allocation2] sm:$0xff]
      %v81 = vld [vmem:[#allocation2 + $0x8] sm:$0xff]
      %v82 = vld [vmem:[%s2] sm:$0x1]
      %v84 = vperm.slane %v82, 0
      %v86 = vadd.f32 %v80, %v84
      %v87 = vadd.f32 %v81, %v84
      %v88 = vmax.f32 %v86, 0.0
      %v89 = vmax.f32 %v87, 0.0
      %v90 = vpack.c.bf16 %v89, %v88
      %v91 = vld [vmem:[%s3] sm:$0xf]
      %v92 = vld [vmem:[%s3 + $0x4] sm:$0xf]
      %v93 = vld [vmem:[%s4] sm:$0x1]
      %v95 = vperm.slane %v93, 0
      %v99 = vunpack.c.l.b16 %v91
      %v100 = vunpack.c.l.b16 %v92
      %v101 = vpack.c.b16 %v100, %v99
      %v104 = vsel %vm74, %v90, 0
      %106 = vmatpush.bf16.msra.mxu0 0
      %107 = vmatpush.bf16.msra.mxu0 0
      %108 = vmatpush.bf16.msra.mxu0 0
      %109 = vmatpush.bf16.msra.mxu0 0
      %110 = vmatpush.bf16.msra.mxu0 0
      %111 = vmatpush.bf16.msra.mxu0 0
      %112 = vmatpush.bf16.msra.mxu0 0
      %113 = vmatpush.bf16.msra.mxu0 %v101
      %114 = vmatmul.bf16.gmra.mxu0 %v104
      %v115 = vpop.f32.mrf.mxu0
      %v116 = vadd.f32 %v95, %v115
      %v117 = vpop.f32.mrf.mxu0
      %v118 = vadd.f32 %v95, %v117
      %119 = vdwg.mxu0
      %v120 = vpack.c.bf16 %v116, %v116
      %v121 = vpack.c.bf16 %v118, %v118
      %122 = vst [vmem:[#allocation3] sm:$0xf] %v120
      %123 = vst [vmem:[#allocation3 + $0x4] sm:$0xf] %v121
    $region29: #{tpu_custom_call.1} parent=1 // pred_fallthru
      _
    // Predicated region
    $region30: #{tpu_custom_call.1} parent=1 // pred_check
      _
    $region31: #{tpu_custom_call.1} parent=1 // pred_check_branch
      %125 = sbr.rel (0) target = $region33
    $region32: #{tpu_custom_call.1} parent=1 // pred_region
      %127 = vsyncadd [#allocation4], 0
      %s128 = sshll.u32 [#allocation3], 4
      %s129 = int_to_ptr.vmem [resolvable:$true] %s128
      %s130 = sshll.u32 %s5, 4
      %s131 = int_to_ptr.hbm [resolvable:$true] %s130
      %136 = dma.vmem_to_hbm [thread:$0]  %s129, 128, %s131, [#allocation4], 64, 64, 4
    $region33: #{tpu_custom_call.1} parent=1 // pred_fallthru
      _
    // Predicated region
    $region34: #{tpu_custom_call.1} parent=1 // pred_check
      _
    $region35: #{tpu_custom_call.1} parent=1 // pred_check_branch
      %138 = sbr.rel (0) target = $region37
    $region36: #{tpu_custom_call.1} parent=1 // pred_region
      %140 = dma.done [#allocation4], 128
    $region37: #{tpu_custom_call.1} parent=1 // pred_fallthru
      _
    %141 = vsyncpa [#allocation4], 1

// kernel: tpu_custom_call.1
$region0: #{tpu_custom_call.1}
  #allocation0 [shape = 'u32[]', space=smem, size = 0x4, offset = 0x4, fixed_abs, tag = 'smem constant byte address 0x4 - core index']
  #allocation1 [shape = 'u32[72,128]{1,0:T(1,128)}', space=vmem, size = 0x9000, scoped, tag = 'internal scratch']
  #allocation2 [shape = 'f32[16,16]{1,0:T(8,128)}', space=vmem, size = 0x2000, scoped, tag = 'scratch operand']
  %s0 = inlined_call_operand.vmem [shape: bf16[16,32], index: 0, kind: input, shape index: {}]
  %s1 = inlined_call_operand.vmem [shape: bf16[32,16], index: 1, kind: input, shape index: {}]
  %s2 = inlined_call_operand.vmem [shape: f32[1,16], index: 2, kind: input, shape index: {}]
  %s3 = inlined_call_operand.vmem [shape: bf16[16,128], index: 3, kind: input, shape index: {}]
  %s4 = inlined_call_operand.vmem [shape: f32[1,128], index: 4, kind: input, shape index: {}]
  %s5 = inlined_call_operand.hbm [shape: bf16[16,128], index: 5, kind: output, shape index: {}]
  %s6 = sld [smem:[#allocation0]]
  $region38: #{tpu_custom_call.1} parent=0
    _
  %s8 = ssub.s32 1, %s6
  %s9 = scalar_select 0, %s8, %s6
  $region1: #{tpu_custom_call.1} parent=0
    #allocation3 [shape = 'u8[4096]{0}', space=vmem, size = 0x1000, scoped, tag = 'output window, operand 0, single buffered']
    #allocation4 [shape = 's32[1]{0}', space=sflag, size = 0x4, scoped, tag = 'scoped memory for tpu_custom_call.1']
    %10 = vsyncpa [#allocation4], 0
    // Predicated region
    $region2: #{tpu_custom_call.1} parent=1 // pred_check
      _
    $region3: #{tpu_custom_call.1} parent=1 // pred_check_branch
      %12 = sbr.rel (0) target = $region5
    $region4: #{tpu_custom_call.1} parent=1 // pred_region
      _
    $region5: #{tpu_custom_call.1} parent=1 // pred_fallthru
      _
    // Predicated region
    $region6: #{tpu_custom_call.1} parent=1 // pred_check
      _
    $region7: #{tpu_custom_call.1} parent=1 // pred_check_branch
      %14 = sbr.rel (0) target = $region9
    $region8: #{tpu_custom_call.1} parent=1 // pred_region
      _
    $region9: #{tpu_custom_call.1} parent=1 // pred_fallthru
      _
    // Predicated region
    $region10: #{tpu_custom_call.1} parent=1 // pred_check
      _
    $region11: #{tpu_custom_call.1} parent=1 // pred_check_branch
      %16 = sbr.rel (0) target = $region13
    $region12: #{tpu_custom_call.1} parent=1 // pred_region
      _
    $region13: #{tpu_custom_call.1} parent=1 // pred_fallthru
      _
    // Predicated region
    $region14: #{tpu_custom_call.1} parent=1 // pred_check
      _
    $region15: #{tpu_custom_call.1} parent=1 // pred_check_branch
      %18 = sbr.rel (0) target = $region17
    $region16: #{tpu_custom_call.1} parent=1 // pred_region
      _
    $region17: #{tpu_custom_call.1} parent=1 // pred_fallthru
      _
    // Predicated region
    $region18: #{tpu_custom_call.1} parent=1 // pred_check
      _
    $region19: #{tpu_custom_call.1} parent=1 // pred_check_branch
      %20 = sbr.rel (0) target = $region21
    $region20: #{tpu_custom_call.1} parent=1 // pred_region
      _
    $region21: #{tpu_custom_call.1} parent=1 // pred_fallthru
      _
    %p22 = scmp.eq.s32.totalorder 0, 0
    // Predicated region
    $region22: #{tpu_custom_call.1} parent=1 // pred_check
      %p23 = pneg %p22
    $region23: #{tpu_custom_call.1} parent=1 // pred_check_branch
      %25 = sbr.rel (%p23) target = $region25
    $region24: #{tpu_custom_call.1} parent=1 // pred_region
      %vm26 = vcmask 130048
      %27 = vst.msk [vmem:[#allocation2] sm:$0xff] %vm26, 0.0
      %28 = vst.msk [vmem:[#allocation2 + $0x8] sm:$0xff] %vm26, 0.0
    $region25: #{tpu_custom_call.1} parent=1 // pred_fallthru
      _
    %v29 = vld [vmem:[#allocation2] sm:$0xff]
    %v30 = vld [vmem:[#allocation2 + $0x8] sm:$0xff]
    %v31 = vld [vmem:[%s0] sm:$0xf]
    %v32 = vld [vmem:[%s0 + $0x4] sm:$0xf]
    %v33 = vld [vmem:[%s1] sm:$0xf]
    %v34 = vld [vmem:[%s1 + $0x4] sm:$0xf]
    %v35 = vld [vmem:[%s1 + $0x8] sm:$0xf]
    %v36 = vld [vmem:[%s1 + $0xc] sm:$0xf]
    %v39 = vunpack.c.l.b16 %v31
    %v40 = vunpack.c.l.b16 %v32
    %v41 = vpack.c.b16 %v40, %v39
    %v46 = vunpack.c.l.b16 %v33
    %v47 = vunpack.c.l.b16 %v34
    %v48 = vunpack.c.l.b16 %v35
    %v49 = vunpack.c.l.b16 %v36
    %v50 = vpack.c.b16 %v47, %v46
    %v51 = vpack.c.b16 %v49, %v48
    %vm54 = vcmask 261120
    %v56 = vsel %vm54, %v41, 0
    %58 = vmatpush.bf16.msra.mxu0 0
    %59 = vmatpush.bf16.msra.mxu0 0
    %60 = vmatpush.bf16.msra.mxu0 0
    %61 = vmatpush.bf16.msra.mxu0 0
    %62 = vmatpush.bf16.msra.mxu0 0
    %63 = vmatpush.bf16.msra.mxu0 0
    %64 = vmatpush.bf16.msra.mxu0 %v51
    %65 = vmatpush.bf16.msra.mxu0 %v50
    %66 = vmatmul.bf16.gmra.mxu0 %v56
    %v67 = vpop.f32.mrf.mxu0
    %v68 = vadd.f32 0.0, %v67
    %v69 = vpop.f32.mrf.mxu0
    %v70 = vadd.f32 0.0, %v69
    %71 = vdwg.mxu0
    %v72 = vadd.f32 %v29, %v68
    %v73 = vadd.f32 %v30, %v70
    %vm74 = vcmask 130048
    %75 = vst.msk [vmem:[#allocation2] sm:$0xff] %vm74, %v72
    %76 = vst.msk [vmem:[#allocation2 + $0x8] sm:$0xff] %vm74, %v73
    // Predicated region
    $region26: #{tpu_custom_call.1} parent=1 // pred_check
      %p77 = pneg %p22
    $region27: #{tpu_custom_call.1} parent=1 // pred_check_branch
      %79 = sbr.rel (%p77) target = $region29
    $region28: #{tpu_custom_call.1} parent=1 // pred_region
      %v80 = vld [vmem:[#allocation2] sm:$0xff]
      %v81 = vld [vmem:[#allocation2 + $0x8] sm:$0xff]
      %v82 = vld [vmem:[%s2] sm:$0x1]
      %v84 = vperm.slane %v82, 0
      %v86 = vadd.f32 %v80, %v84
      %v87 = vadd.f32 %v81, %v84
      %v88 = vmax.f32 %v86, 0.0
      %v89 = vmax.f32 %v87, 0.0
      %v90 = vpack.c.bf16 %v89, %v88
      %v91 = vld [vmem:[%s3] sm:$0xf]
      %v92 = vld [vmem:[%s3 + $0x4] sm:$0xf]
      %v93 = vld [vmem:[%s4] sm:$0x1]
      %v95 = vperm.slane %v93, 0
      %v99 = vunpack.c.l.b16 %v91
      %v100 = vunpack.c.l.b16 %v92
      %v101 = vpack.c.b16 %v100, %v99
      %v104 = vsel %vm74, %v90, 0
      %106 = vmatpush.bf16.msra.mxu0 0
      %107 = vmatpush.bf16.msra.mxu0 0
      %108 = vmatpush.bf16.msra.mxu0 0
      %109 = vmatpush.bf16.msra.mxu0 0
      %110 = vmatpush.bf16.msra.mxu0 0
      %111 = vmatpush.bf16.msra.mxu0 0
      %112 = vmatpush.bf16.msra.mxu0 0
      %113 = vmatpush.bf16.msra.mxu0 %v101
      %114 = vmatmul.bf16.gmra.mxu0 %v104
      %v115 = vpop.f32.mrf.mxu0
      %v116 = vadd.f32 %v95, %v115
      %v117 = vpop.f32.mrf.mxu0
      %v118 = vadd.f32 %v95, %v117
      %119 = vdwg.mxu0
      %v120 = vpack.c.bf16 %v116, %v116
      %v121 = vpack.c.bf16 %v118, %v118
      %122 = vst [vmem:[#allocation3] sm:$0xf] %v120
      %123 = vst [vmem:[#allocation3 + $0x4] sm:$0xf] %v121
    $region29: #{tpu_custom_call.1} parent=1 // pred_fallthru
      _
    // Predicated region
    $region30: #{tpu_custom_call.1} parent=1 // pred_check
      _
    $region31: #{tpu_custom_call.1} parent=1 // pred_check_branch
      %125 = sbr.rel (0) target = $region33
    $region32: #{tpu_custom_call.1} parent=1 // pred_region
      %127 = vsyncadd [#allocation4], 0
      %s128 = sshll.u32 [#allocation3], 4
      %s129 = int_to_ptr.vmem [resolvable:$true] %s128
      %s130 = sshll.u32 %s5, 4
      %s131 = int_to_ptr.hbm [resolvable:$true] %s130
      %136 = dma.vmem_to_hbm [thread:$0]  %s129, 128, %s131, [#allocation4], 64, 64, 4
    $region33: #{tpu_custom_call.1} parent=1 // pred_fallthru
      _
    // Predicated region
    $region34: #{tpu_custom_call.1} parent=1 // pred_check
      _
    $region35: #{tpu_custom_call.1} parent=1 // pred_check_branch
      %138 = sbr.rel (0) target = $region37
    $region36: #{tpu_custom_call.1} parent=1 // pred_region
      %140 = dma.done [#allocation4], 128
    $region37: #{tpu_custom_call.1} parent=1 // pred_fallthru
      _
    %141 = vsyncpa [#allocation4], 1

</llo_original>
